<compile_context>
chip_gen: v6e
topology: v6e:2x2x1
jax: 0.10.0
libtpu: 0.0.40
codegen_flags: <defaults>
</compile_context>

<pallas_src>
import math

import jax
import jax.numpy as jnp
from jax.experimental import pallas as pl
from jax.experimental.pallas import tpu as pltpu

BN_EPS = 1e-5
BN_SCALE = 1.0 / math.sqrt(1.0 + BN_EPS)  # eval-mode BN with running_mean=0, running_var=1


def _max_mil_pool_kernel(bags_ref, w1_ref, b1_ref, pooled_ref):
    # bags_ref:   (TB, N, F)  compute dtype (bf16 by default)
    # w1_ref:     (F, Z)      compute dtype
    # b1_ref:     (1, Z)      f32
    # pooled_ref: (TB, Z)     f32 : max over patches of ReLU(x @ W1 + b1)
    tb, n, f = bags_ref.shape
    x = bags_ref[...].reshape(tb * n, f)                               # fuse bags into one MXU M-dim
    h = jnp.dot(x, w1_ref[...], preferred_element_type=jnp.float32)    # (TB*N, Z), f32 accumulation
    h = jnp.maximum(h + b1_ref[...], 0.0)                              # bias + ReLU (f32, VPU)
    h = h.reshape(tb, n, h.shape[-1])
    # Per-bag max over patches.  The eval-mode BN scales are applied outside the kernel:
    # they are positive, so scaling commutes with this max.
    pooled_ref[...] = jnp.max(h, axis=1).astype(pooled_ref.dtype)


def _choose_block_bags(B, N, F, Z, in_dtype_bytes):
    """Pick TB (bags per grid step): aim for >=~512 MXU rows per step, keep the
    double-buffered VMEM footprint small (v7x has only 64 MiB/TC), and use a
    multiple of 8 whenever the grid has more than one block."""
    target_rows = 512
    tb = -(-target_rows // N)  # ceil
    # 2x double-buffered bags block + f32 (TB*N, Z) intermediate + (TB, Z) output block
    per_bag_bytes = 2 * N * F * in_dtype_bytes + N * Z * 4 + Z * 4
    vmem_budget = 16 * 1024 * 1024
    tb = max(1, min(tb, vmem_budget // max(per_bag_bytes, 1)))
    if tb >= B:
        return B  # single grid step: block first dim == full (padded) batch dim
    return max(8, (tb // 8) * 8)


def max_mil_forward(bags, w1, b1, w2, b2, *, compute_dtype=jnp.bfloat16, block_bags=None):
    """bags: (B, N, F); w1: (F, Z); b1: (Z,); w2: (Z, n_out); b2: (n_out,)."""
    B, N, F = bags.shape
    Fw, Z = w1.shape
    assert Fw == F
    Zw, n_out = w2.shape
    assert Zw == Z

    in_bytes = jnp.dtype(compute_dtype).itemsize
    TB = block_bags if block_bags is not None else _choose_block_bags(B, N, F, Z, in_bytes)

    num_blocks = -(-B // TB)  # ceil
    B_pad = num_blocks * TB

    bags_c = bags.astype(compute_dtype)
    if B_pad != B:
        # Zero-pad whole bags; their pooled rows are sliced off below, so no masking needed.
        bags_c = jnp.pad(bags_c, ((0, B_pad - B), (0, 0), (0, 0)))
    w1_c = w1.astype(compute_dtype)
    b1_2d = b1.reshape(1, Z).astype(jnp.float32)

    pooled = pl.pallas_call(
        _max_mil_pool_kernel,
        out_shape=jax.ShapeDtypeStruct((B_pad, Z), jnp.float32),
        grid_spec=pltpu.PrefetchScalarGridSpec(
            num_scalar_prefetch=0,
            grid=(num_blocks,),
            in_specs=[
                pl.BlockSpec((TB, N, F), lambda b: (b, 0, 0)),
                # Constant-index weight/bias blocks; default double-buffering is negligible
                # at these sizes (consider pl.Buffered(1) via pipeline_mode if F/Z grow large).
                pl.BlockSpec((F, Z), lambda b: (0, 0)),
                pl.BlockSpec((1, Z), lambda b: (0, 0)),
            ],
            out_specs=pl.BlockSpec((TB, Z), lambda b: (b, 0)),
        ),
        compiler_params=pltpu.CompilerParams(
            dimension_semantics=("parallel",),          # bag blocks shard across TCs (v7x megacore)
            vmem_limit_bytes=48 * 1024 * 1024,          # above 32 MiB default, headroom on v7x's 64 MiB
        ),
    )(bags_c, w1_c, b1_2d)

    pooled = pooled[:B]
    # Head: Flatten(noop) -> BN(eval) -> Dropout(identity) -> Linear.
    # Both BN scales are positive constants, so they commute with the in-kernel max and
    # are folded into w2 here; the tiny (B, Z)@(Z, n_out) matmul stays in XLA so the
    # kernel's output remains lane-dense (Z wide) instead of n_out(=4) wide.
    w2_eff = w2.astype(jnp.float32) * (BN_SCALE * BN_SCALE)
    scores = pooled @ w2_eff + b2.astype(jnp.float32)
    return scores


def _reference_forward(bags, w1, b1, w2, b2):
    B, N, F = bags.shape
    h = jnp.maximum(bags.reshape(-1, F) @ w1 + b1, 0.0) * BN_SCALE
    h = h.reshape(B, N, -1)
    pooled = jnp.max(h, axis=1) * BN_SCALE
    return pooled @ w2 + b2


def _xavier_normal(key, fan_in, fan_out):
    std = math.sqrt(2.0 / (fan_in + fan_out))
    # Stored transposed: (fan_in, fan_out) so the kernel can do x @ W directly.
    return std * jax.random.normal(key, (fan_in, fan_out), dtype=jnp.float32)


if __name__ == "__main__":
    # Small shapes consistent with the module: bags (batch, n_patches, n_feats).
    B, N, F = 2, 8, 32       # batch=2, 8 patches per bag, 32 input features
    Z, n_out = 32, 4         # latent dim, number of classes

    key = jax.random.PRNGKey(0)
    k_bags, k_bags2, k_w1, k_w2 = jax.random.split(key, 4)

    bags = jax.random.normal(k_bags, (B, N, F), dtype=jnp.float32)

    # Deterministic parameter init matching initialize_weights():
    # Xavier-normal linear weights, zero biases; BN weight=1, bias=0 (folded into BN_SCALE).
    w1 = _xavier_normal(k_w1, F, Z)          # encoder Linear(n_feats, z_dim), transposed
    b1 = jnp.zeros((Z,), dtype=jnp.float32)
    w2 = _xavier_normal(k_w2, Z, n_out)      # head Linear(z_dim, n_out), transposed
    b2 = jnp.zeros((n_out,), dtype=jnp.float32)

    ref = _reference_forward(bags, w1, b1, w2, b2)

    # Default bf16-compute path (f32 accumulation on the MXU).
    scores = max_mil_forward(bags, w1, b1, w2, b2)
    jax.block_until_ready(scores)
    assert scores.shape == (B, n_out)
    assert jnp.allclose(scores, ref, atol=5e-2, rtol=5e-2), "bf16 kernel mismatch vs reference"

    # f32-compute path for a tight numerical check.
    scores_f32 = max_mil_forward(bags, w1, b1, w2, b2, compute_dtype=jnp.float32)
    jax.block_until_ready(scores_f32)
    assert jnp.allclose(scores_f32, ref, atol=1e-4, rtol=1e-4), "f32 kernel mismatch vs reference"

    # Exercise the multi-block grid + batch-padding path (B not a multiple of TB).
    B2, N2 = 48, 16
    bags2 = jax.random.normal(k_bags2, (B2, N2, F), dtype=jnp.float32)
    scores2 = max_mil_forward(bags2, w1, b1, w2, b2)
    jax.block_until_ready(scores2)
    ref2 = _reference_forward(bags2, w1, b1, w2, b2)
    assert scores2.shape == (B2, n_out)
    assert jnp.allclose(scores2, ref2, atol=5e-2, rtol=5e-2), "batched kernel mismatch vs reference"

    print("KERNEL_OK")
</pallas_src>

<mosaic_0001>
module attributes {stable_mosaic.version = 11 : i64} {
  func.func @_max_mil_pool_kernel(%arg0: i32, %arg1: memref<2x8x32xbf16, #tpu.memory_space<vmem>>, %arg2: memref<32x32xbf16, #tpu.memory_space<vmem>>, %arg3: memref<1x32xf32, #tpu.memory_space<vmem>>, %arg4: memref<2x32xf32, #tpu.memory_space<vmem>>) attributes {dimension_semantics = [#tpu.dimension_semantics<parallel>], iteration_bounds = array<i64: 1>, scalar_prefetch = 0 : i64, scratch_operands = 0 : i64, tpu.core_type = #tpu.core_type<tc>, window_params = [{transform_indices = @transform_0, window_bounds = array<i64: 2, 8, 32>}, {pipeline_mode = #tpu.pipeline_mode<synchronous>, transform_indices = @transform_1, window_bounds = array<i64: 32, 32>}, {pipeline_mode = #tpu.pipeline_mode<synchronous>, transform_indices = @transform_2, window_bounds = array<i64: 1, 32>}, {transform_indices = @transform_3, window_bounds = array<i64: 2, 32>}]} {
    %c0 = arith.constant 0 : index
    %c0_0 = arith.constant 0 : index
    %c0_1 = arith.constant 0 : index
    %0 = vector.load %arg1[%c0, %c0_0, %c0_1] : memref<2x8x32xbf16, #tpu.memory_space<vmem>>, vector<2x8x32xbf16>
    %1 = vector.shape_cast %0 : vector<2x8x32xbf16> to vector<16x32xbf16>
    %c0_2 = arith.constant 0 : index
    %c0_3 = arith.constant 0 : index
    %2 = vector.load %arg2[%c0_2, %c0_3] : memref<32x32xbf16, #tpu.memory_space<vmem>>, vector<32x32xbf16>
    %cst = arith.constant dense<0.000000e+00> : vector<16x32xf32>
    %3 = tpu.matmul %1, %2, %cst {dimension_numbers = #tpu.dot_dimension_numbers<[1], [0], [0], [1], [0, 0, 1, 1], [], []>} : vector<16x32xbf16>, vector<32x32xbf16>, vector<16x32xf32> -> vector<16x32xf32>
    %c0_4 = arith.constant 0 : index
    %c0_5 = arith.constant 0 : index
    %4 = vector.load %arg3[%c0_4, %c0_5] : memref<1x32xf32, #tpu.memory_space<vmem>>, vector<1x32xf32>
    %5 = vector.broadcast %4 : vector<1x32xf32> to vector<16x32xf32>
    %6 = arith.addf %3, %5 : vector<16x32xf32>
    %cst_6 = arith.constant 0.000000e+00 : f32
    %7 = vector.broadcast %cst_6 : f32 to vector<16x32xf32>
    %8 = arith.maximumf %6, %7 : vector<16x32xf32>
    %9 = vector.shape_cast %8 : vector<16x32xf32> to vector<2x8x32xf32>
    %cst_7 = arith.constant dense<0xFF800000> : vector<2x32xf32>
    %10 = vector.multi_reduction <maximumf>, %9, %cst_7 [1] : vector<2x8x32xf32> to vector<2x32xf32>
    %c0_8 = arith.constant 0 : index
    %c0_9 = arith.constant 0 : index
    %11 = vector.load %arg4[%c0_8, %c0_9] : memref<2x32xf32, #tpu.memory_space<vmem>>, vector<2x32xf32>
    tpu.vector_store %arg4[%c0_8, %c0_9], %10 {strides = array<i32>} : memref<2x32xf32, #tpu.memory_space<vmem>>, vector<2x32xf32>,
    return
  }
  func.func @transform_0(%arg0: i32) -> (i32, i32, i32) {
    %c0_i32 = arith.constant 0 : i32
    %c0_i32_0 = arith.constant 0 : i32
    %c0_i32_1 = arith.constant 0 : i32
    return %arg0, %c0_i32, %c0_i32_0 : i32, i32, i32
  }
  func.func @transform_1(%arg0: i32) -> (i32, i32) {
    %c0_i32 = arith.constant 0 : i32
    %c0_i32_0 = arith.constant 0 : i32
    %c0_i32_1 = arith.constant 0 : i32
    return %c0_i32, %c0_i32_0 : i32, i32
  }
  func.func @transform_2(%arg0: i32) -> (i32, i32) {
    %c0_i32 = arith.constant 0 : i32
    %c0_i32_0 = arith.constant 0 : i32
    %c0_i32_1 = arith.constant 0 : i32
    return %c0_i32, %c0_i32_0 : i32, i32
  }
  func.func @transform_3(%arg0: i32) -> (i32, i32) {
    %c0_i32 = arith.constant 0 : i32
    %c0_i32_0 = arith.constant 0 : i32
    return %arg0, %c0_i32 : i32, i32
  }
}

</mosaic_0001>

<llo_original>
// kernel: tpu_custom_call.1
$region0: #{tpu_custom_call.1}
  #allocation0 [shape = 'u32[]', space=smem, size = 0x4, offset = 0x4, fixed_abs, tag = 'smem constant byte address 0x4 - core index']
  #allocation1 [shape = 'u32[144,128]{1,0:T(1,128)}', space=vmem, size = 0x12000, scoped, tag = 'internal scratch']
  %s0 = inlined_call_operand.hbm [shape: bf16[2,8,32], index: 0, kind: input, shape index: {}]
  %s1 = inlined_call_operand.hbm [shape: bf16[32,32], index: 1, kind: input, shape index: {}]
  %s2 = inlined_call_operand.vmem [shape: f32[1,32], index: 2, kind: input, shape index: {}]
  %s3 = inlined_call_operand.hbm [shape: f32[2,32], index: 3, kind: output, shape index: {}]
  %s4 = sld [smem:[#allocation0]]
  $region30: #{tpu_custom_call.1} parent=0
    _
  %s6 = ssub.s32 1, %s4
  %s7 = scalar_select 0, %s6, %s4
  $region1: #{tpu_custom_call.1} parent=0
    #allocation2 [shape = 'u8[4096]{0}', space=vmem, size = 0x1000, scoped, tag = 'input window, operand 0, single buffered']
    #allocation3 [shape = 's32[1]{0}', space=sflag, size = 0x4, scoped, tag = 'scoped memory for tpu_custom_call.1']
    #allocation4 [shape = 's32[1]{0}', space=sflag, size = 0x4, scoped, tag = 'scoped memory for tpu_custom_call.1']
    #allocation5 [shape = 'u8[8192]{0}', space=vmem, size = 0x2000, scoped, tag = 'input window, operand 1, single buffered']
    #allocation6 [shape = 's32[1]{0}', space=sflag, size = 0x4, scoped, tag = 'scoped memory for tpu_custom_call.1']
    #allocation7 [shape = 'u8[1024]{0}', space=vmem, size = 0x400, scoped, tag = 'output window, operand 0, single buffered']
    %8 = vsyncpa [#allocation3], 0
    %9 = vsyncpa [#allocation6], 0
    %10 = vsyncpa [#allocation4], 0
    // Predicated region
    $region2: #{tpu_custom_call.1} parent=1 // pred_check
      _
    $region3: #{tpu_custom_call.1} parent=1 // pred_check_branch
      %12 = sbr.rel (0) target = $region5
    $region4: #{tpu_custom_call.1} parent=1 // pred_region
      %s14 = ssub.s32 128, 128
      %15 = vsyncadd [#allocation3], %s14
      %s16 = sshll.u32 [#allocation2], 4
      %s17 = int_to_ptr.vmem [resolvable:$true] %s16
      %22 = dma.hbm_to_vmem [thread:$0]  %s0, 128, %s17, [#allocation3], 64, 64, 4
    $region5: #{tpu_custom_call.1} parent=1 // pred_fallthru
      _
    // Predicated region
    $region6: #{tpu_custom_call.1} parent=1 // pred_check
      _
    $region7: #{tpu_custom_call.1} parent=1 // pred_check_branch
      %24 = sbr.rel (0) target = $region9
    $region8: #{tpu_custom_call.1} parent=1 // pred_region
      %s26 = ssub.s32 256, 256
      %27 = vsyncadd [#allocation6], %s26
      %s28 = sshll.u32 [#allocation5], 4
      %s29 = int_to_ptr.vmem [resolvable:$true] %s28
      %34 = dma.hbm_to_vmem [thread:$0]  %s1, 256, %s29, [#allocation6], 64, 64, 4
    $region9: #{tpu_custom_call.1} parent=1 // pred_fallthru
      _
    // Predicated region
    $region10: #{tpu_custom_call.1} parent=1 // pred_check
      _
    $region11: #{tpu_custom_call.1} parent=1 // pred_check_branch
      %36 = sbr.rel (0) target = $region13
    $region12: #{tpu_custom_call.1} parent=1 // pred_region
      _
    $region13: #{tpu_custom_call.1} parent=1 // pred_fallthru
      _
    // Predicated region
    $region14: #{tpu_custom_call.1} parent=1 // pred_check
      _
    $region15: #{tpu_custom_call.1} parent=1 // pred_check_branch
      %38 = sbr.rel (0) target = $region17
    $region16: #{tpu_custom_call.1} parent=1 // pred_region
      %39 = dma.done [#allocation3], 128
    $region17: #{tpu_custom_call.1} parent=1 // pred_fallthru
      _
    // Predicated region
    $region18: #{tpu_custom_call.1} parent=1 // pred_check
      _
    $region19: #{tpu_custom_call.1} parent=1 // pred_check_branch
      %41 = sbr.rel (0) target = $region21
    $region20: #{tpu_custom_call.1} parent=1 // pred_region
      %42 = dma.done [#allocation6], 256
    $region21: #{tpu_custom_call.1} parent=1 // pred_fallthru
      _
    %v44 = vld [vmem:[#allocation2] sm:$0xf]
    %v45 = vld [vmem:[#allocation2 + $0x4] sm:$0xf]
    %v46 = vld [vmem:[#allocation5] sm:$0xf]
    %v47 = vld [vmem:[#allocation5 + $0x4] sm:$0xf]
    %v48 = vld [vmem:[#allocation5 + $0x8] sm:$0xf]
    %v49 = vld [vmem:[#allocation5 + $0xc] sm:$0xf]
    %v50 = vld [vmem:[%s2] sm:$0x1]
    %v52 = vlaneseq
    %v53 = vshrl.u32 %v52, 7
    %v54 = vsub.s32 0, %v53
    %v55 = vrot.slane %v50, %v54
    %v59 = vunpack.c.l.b16 %v44
    %v60 = vunpack.c.l.b16 %v45
    %v61 = vpack.c.b16 %v60, %v59
    %v66 = vunpack.c.l.b16 %v46
    %v67 = vunpack.c.l.b16 %v47
    %v68 = vunpack.c.l.b16 %v48
    %v69 = vunpack.c.l.b16 %v49
    %v70 = vpack.c.b16 %v67, %v66
    %v71 = vpack.c.b16 %v69, %v68
    %vm74 = vcmask 261120
    %v76 = vsel %vm74, %v61, 0
    %78 = vmatprep.subr.bf16.mxu0 0
    %79 = vmatpush1.bf16.msra.mxu0 0
    %80 = vmatprep.subr.bf16.mxu0 0
    %81 = vmatpush1.bf16.msra.mxu0 0
    %82 = vmatprep.subr.bf16.mxu0 0
    %83 = vmatpush1.bf16.msra.mxu0 0
    %84 = vmatprep.subr.bf16.mxu0 0
    %85 = vmatpush1.bf16.msra.mxu0 0
    %86 = vmatprep.subr.bf16.mxu0 0
    %87 = vmatpush1.bf16.msra.mxu0 0
    %88 = vmatprep.subr.bf16.mxu0 0
    %89 = vmatpush1.bf16.msra.mxu0 0
    %90 = vmatprep.subr.bf16.mxu0 0
    %91 = vmatpush1.bf16.msra.mxu0 %v71
    %92 = vmatprep.subr.bf16.mxu0 0
    %93 = vmatpush1.bf16.msra.mxu0 %v70
    %94 = vmatprep.subr.bf16.mxu0 0
    %95 = vmatpush2.bf16.msra.mxu0 0
    %96 = vmatprep.subr.bf16.mxu0 0
    %97 = vmatpush2.bf16.msra.mxu0 0
    %98 = vmatprep.subr.bf16.mxu0 0
    %99 = vmatpush2.bf16.msra.mxu0 0
    %100 = vmatprep.subr.bf16.mxu0 0
    %101 = vmatpush2.bf16.msra.mxu0 0
    %102 = vmatprep.subr.bf16.mxu0 0
    %103 = vmatpush2.bf16.msra.mxu0 0
    %104 = vmatprep.subr.bf16.mxu0 0
    %105 = vmatpush2.bf16.msra.mxu0 0
    %106 = vmatprep.subr.bf16.mxu0 0
    %107 = vmatpush2.bf16.msra.mxu0 0
    %108 = vmatprep.subr.bf16.mxu0 0
    %109 = vmatpush2.bf16.msra.mxu0 0
    %110 = vmatprep.mubr.bf16.mxu0 0
    %111 = vmatmul.mubr.bf16.gmra.mxu0 %v76
    %v112 = vpop.f32.mrf.mxu0
    %v113 = vadd.f32 %v55, %v112
    %v114 = vpop.f32.mrf.mxu0
    %v115 = vpop.f32.mrf.mxu0
    %v116 = vadd.f32 %v55, %v115
    %v117 = vpop.f32.mrf.mxu0
    %118 = vdwg.mxu0
    %v119 = vmax.f32 %v113, 0.0
    %v120 = vmax.f32 %v116, 0.0
    %v121 = vsel %vm74, %v119, -inf
    %v122 = vrot.slane %v121, 4
    %v123 = vmax.f32 %v121, %v122
    %v124 = vrot.slane %v123, 2
    %v125 = vmax.f32 %v123, %v124
    %v126 = vrot.slane %v125, 1
    %v127 = vmax.f32 %v125, %v126
    %v128 = vsel %vm74, %v120, -inf
    %v129 = vrot.slane %v128, 4
    %v130 = vmax.f32 %v128, %v129
    %v131 = vrot.slane %v130, 2
    %v132 = vmax.f32 %v130, %v131
    %v133 = vrot.slane %v132, 1
    %v134 = vmax.f32 %v132, %v133
    %vm137 = vcmask 1041409
    %v138 = vsel %vm137, %v134, %v127
    %vm140 = vcmask 254976
    %141 = vst.msk [vmem:[#allocation7] sm:$0x3] %vm140, %v138
    // Predicated region
    $region22: #{tpu_custom_call.1} parent=1 // pred_check
      _
    $region23: #{tpu_custom_call.1} parent=1 // pred_check_branch
      %143 = sbr.rel (0) target = $region25
    $region24: #{tpu_custom_call.1} parent=1 // pred_region
      %s145 = ssub.s32 32, 32
      %146 = vsyncadd [#allocation4], %s145
      %s148 = sshll.u32 [#allocation7], 4
      %s149 = int_to_ptr.vmem [resolvable:$true] %s148
      %151 = dma.vmem_to_hbm [thread:$0]  %s149, 32, %s3, [#allocation4]
    $region25: #{tpu_custom_call.1} parent=1 // pred_fallthru
      _
    // Predicated region
    $region26: #{tpu_custom_call.1} parent=1 // pred_check
      _
    $region27: #{tpu_custom_call.1} parent=1 // pred_check_branch
      %153 = sbr.rel (0) target = $region29
    $region28: #{tpu_custom_call.1} parent=1 // pred_region
      %154 = dma.done [#allocation4], 32
    $region29: #{tpu_custom_call.1} parent=1 // pred_fallthru
      _
    %155 = vsyncpa [#allocation3], 1
    %156 = vsyncpa [#allocation6], 1
    %157 = vsyncpa [#allocation4], 1

</llo_original>
